<compile_context>
chip_gen: v6e
topology: v6e:2x2x1
jax: 0.10.0
libtpu: 0.0.40
codegen_flags: <defaults>
</compile_context>

<pallas_src>
import jax
import jax.numpy as jnp
from jax import lax
from jax.experimental import pallas as pl
from jax.experimental.pallas import tpu as pltpu

EPS = 1e-5  # torch.nn.LayerNorm default


# ----------------------------------------------------------------------------
# Kernels
# ----------------------------------------------------------------------------
def _two_layernorms(x1, x2, p):
    """p is (4, D) f32: rows = [gamma1, beta1, gamma2, beta2]."""
    def ln(x, g, b):
        x = x.astype(jnp.float32)
        mean = jnp.mean(x, axis=-1, keepdims=True)
        meansq = jnp.mean(x * x, axis=-1, keepdims=True)
        var = jnp.maximum(meansq - mean * mean, 0.0)   # biased var, like torch
        inv = lax.rsqrt(var + EPS)
        return (x - mean) * inv * g + b

    n1 = ln(x1, p[0:1, :], p[1:2, :])
    n2 = ln(x2, p[2:3, :], p[3:4, :])
    return n1, n2


def _prenorm2in_kernel_2out(x1_ref, x2_ref, p_ref, y1_ref, y2_ref):
    n1, n2 = _two_layernorms(x1_ref[...], x2_ref[...], p_ref[...])
    y1_ref[...] = n1.astype(y1_ref.dtype)
    y2_ref[...] = n2.astype(y2_ref.dtype)


def _make_fused_kernel(combine):
    """Fuses an elementwise `fn(n1, n2)` into the epilogue (single output)."""
    def kernel(x1_ref, x2_ref, p_ref, y_ref):
        n1, n2 = _two_layernorms(x1_ref[...], x2_ref[...], p_ref[...])
        y_ref[...] = combine(n1, n2).astype(y_ref.dtype)
    return kernel


# ----------------------------------------------------------------------------
# Generation-aware sizing helpers
# ----------------------------------------------------------------------------
def _tpu_vmem_capacity_bytes():
    try:
        info = pltpu.get_tpu_info()
        cap = int(getattr(info, "vmem_capacity_bytes", 0) or 0)
        if cap > 0:
            return cap
    except Exception:
        pass
    return 64 << 20  # conservative (v7x-sized); correct everywhere


def _pick_row_tile(BN, D, n_out, elem_in, elem_out, min_itemsize,
                   vmem_budget, multi_tc, buffer_count):
    # dtype-aware sublane alignment: 8 (f32) / 16 (bf16) / 32 (int8, fp8)
    sub = 8 * max(1, 4 // max(min_itemsize, 1))

    # HBM bytes per row per step (2 inputs + outputs). Target ~8 MiB per grid
    # step so the ~0.35us fixed per-step overhead stays <5% even on v7x HBM.
    row_hbm = 2 * D * elem_in + n_out * D * elem_out
    tm_target = (8 << 20) // max(row_hbm, 1)

    # VMEM per row: multi-buffered I/O blocks + ~6 f32 temporaries / element
    # (upcasts and centered copies inside the kernel).
    row_vmem = buffer_count * row_hbm + 6 * D * 4
    tm_vmem = vmem_budget // max(row_vmem, 1)

    tm = min(tm_target, tm_vmem, 4096)

    # Never exceed the (sublane-rounded) row count; on 2-TC parts keep the
    # PARALLEL grid at >= 2 steps so both TensorCores get work.
    rows_cap = ((BN + sub - 1) // sub) * sub
    if multi_tc and BN > sub:
        half = (BN + 1) // 2
        rows_cap = ((half + sub - 1) // sub) * sub
    tm = min(tm, rows_cap)
    tm = max(sub, (tm // sub) * sub)
    return tm


# ----------------------------------------------------------------------------
# Wrapper
# ----------------------------------------------------------------------------
def prenorm2in_apply(x1, x2, params, *, combine=None, buffer_count=2):
    """norm1(x1), norm2(x2) (combine=None) or combine(norm1(x1), norm2(x2)).

    x1, x2: (B, N, D).  params: dict with g1, b1, g2, b2, each (D,).
    """
    B, N, D = x1.shape
    assert x2.shape == x1.shape, "x1/x2 must have identical shapes"
    BN = B * N

    # TODO(synk): for production shapes where D is not a multiple of 128,
    # restack features in the wrapper so the kernel's last dim is lane-dense.
    x1f = x1.reshape(BN, D)
    x2f = x2.reshape(BN, D)

    # Stack + cast LayerNorm params once: (4, D) f32 = [g1, b1, g2, b2].
    p = jnp.stack([params["g1"].reshape(D), params["b1"].reshape(D),
                   params["g2"].reshape(D), params["b2"].reshape(D)],
                  axis=0).astype(jnp.float32)

    if combine is None:
        out_dtypes = (x1.dtype, x2.dtype)
    else:
        out_dtypes = (jnp.result_type(x1.dtype, x2.dtype),)
    n_out = len(out_dtypes)

    elem_in = max(jnp.dtype(x1.dtype).itemsize, jnp.dtype(x2.dtype).itemsize)
    elem_out = max(jnp.dtype(d).itemsize for d in out_dtypes)
    min_itemsize = min([jnp.dtype(x1.dtype).itemsize,
                        jnp.dtype(x2.dtype).itemsize]
                       + [jnp.dtype(d).itemsize for d in out_dtypes])

    vmem_cap = _tpu_vmem_capacity_bytes()
    multi_tc = vmem_cap <= (96 << 20)     # v7x-like: 64 MiB VMEM, 2 TCs/chip
    vmem_budget = vmem_cap // 2           # block-buffer budget (64 MiB v5e/v6e, 32 MiB v7x)

    tm = _pick_row_tile(BN, D, n_out, elem_in, elem_out, min_itemsize,
                        vmem_budget, multi_tc, buffer_count)
    grid_rows = pl.cdiv(BN, tm)           # ragged tail handled by masked edge block

    row_spec_out = pl.BlockSpec((tm, D), lambda i: (i, 0))
    if buffer_count == 2:
        row_spec_in = row_spec_out
    else:
        # TODO(synk): sweep buffer_count=3 on production shapes (hides DMA
        # issue jitter; VMEM headroom accounted for in the footprint below).
        row_spec_in = pl.BlockSpec((tm, D), lambda i: (i, 0),
                                   pipeline_mode=pl.Buffered(buffer_count))
    par_spec = pl.BlockSpec((4, D), lambda i: (0, 0))

    # VMEM limit from the actual footprint: multi-buffered I/O blocks +
    # params + in-kernel f32 intermediates, with headroom.
    footprint = (buffer_count * (2 * tm * D * elem_in + n_out * tm * D * elem_out)
                 + 2 * 4 * D * 4
                 + 6 * tm * D * 4)
    vmem_limit = int(footprint * 1.25) + (2 << 20)
    vmem_limit = max(vmem_limit, 16 << 20)
    vmem_limit = min(vmem_limit, vmem_cap - (8 << 20))

    if combine is None:
        kernel = _prenorm2in_kernel_2out
        out_shape = (jax.ShapeDtypeStruct((BN, D), out_dtypes[0]),
                     jax.ShapeDtypeStruct((BN, D), out_dtypes[1]))
        out_specs = [row_spec_out, row_spec_out]
    else:
        kernel = _make_fused_kernel(combine)
        out_shape = (jax.ShapeDtypeStruct((BN, D), out_dtypes[0]),)
        out_specs = [row_spec_out]

    result = pl.pallas_call(
        kernel,
        out_shape=out_shape,
        grid_spec=pltpu.PrefetchScalarGridSpec(
            num_scalar_prefetch=0,
            grid=(grid_rows,),
            in_specs=[row_spec_in, row_spec_in, par_spec],
            out_specs=out_specs,
        ),
        compiler_params=pltpu.CompilerParams(
            dimension_semantics=(pltpu.PARALLEL,),   # rows shard across TCs on v7x
            vmem_limit_bytes=int(vmem_limit)),
    )(x1f, x2f, p)

    if combine is None:
        y1f, y2f = result
        return y1f.reshape(B, N, D), y2f.reshape(B, N, D)
    (yf,) = result
    return yf.reshape(B, N, D)


def prenorm2in_forward(x1, x2, params, fn, attention_weights=None, *,
                       fn_is_elementwise=False):
    """Exact PreNorm2in forward: fn(norm1(x1), norm2(x2)[, attention_weights])."""
    if fn_is_elementwise and attention_weights is None:
        # Elementwise fn fused into the kernel epilogue: one output write
        # instead of two, and the garbage tail rows of a ragged edge block
        # never leave the kernel.
        return prenorm2in_apply(x1, x2, params, combine=fn)
    # TODO(synk): if the real `fn` starts with a projection matmul, fuse that
    # first GEMM as the kernel epilogue instead (avoids the n1/n2 HBM round
    # trip and engages the otherwise-idle MXU).
    n1, n2 = prenorm2in_apply(x1, x2, params)
    if attention_weights is not None:
        return fn(n1, n2, attention_weights)
    return fn(n1, n2)


# ----------------------------------------------------------------------------
# Reference + demo
# ----------------------------------------------------------------------------
def _layernorm_ref(x, g, b):
    x32 = x.astype(jnp.float32)
    mean = jnp.mean(x32, axis=-1, keepdims=True)
    var = jnp.mean((x32 - mean) ** 2, axis=-1, keepdims=True)
    return (x32 - mean) / jnp.sqrt(var + EPS) * g + b


if __name__ == "__main__":
    key = jax.random.PRNGKey(0)
    ks = jax.random.split(key, 8)

    D = 128  # lane-dense feature dim
    params = {
        "g1": 1.0 + 0.1 * jax.random.normal(ks[0], (D,), dtype=jnp.float32),
        "b1": 0.1 * jax.random.normal(ks[1], (D,), dtype=jnp.float32),
        "g2": 1.0 + 0.1 * jax.random.normal(ks[2], (D,), dtype=jnp.float32),
        "b2": 0.1 * jax.random.normal(ks[3], (D,), dtype=jnp.float32),
    }
    fn_add = lambda a, b: a + b  # stand-in for the injected elementwise `fn`

    # 1) fused elementwise-fn path (single fused output write)
    B, N = 2, 8
    x1 = jax.random.normal(ks[4], (B, N, D), dtype=jnp.float32)
    x2 = jax.random.normal(ks[5], (B, N, D), dtype=jnp.float32)
    out = prenorm2in_forward(x1, x2, params, fn_add, fn_is_elementwise=True)
    out = jax.block_until_ready(out)
    ref = (_layernorm_ref(x1, params["g1"], params["b1"])
           + _layernorm_ref(x2, params["g2"], params["b2"]))
    assert out.shape == (B, N, D)
    assert jnp.allclose(out, ref, atol=1e-4, rtol=1e-4), "fused path mismatch"

    # 2) generic-fn path with a ragged row count (B*N = 22, not a tile
    #    multiple) -> exercises the masked edge block, no wrapper pad/slice.
    B2, N2 = 2, 11
    x1r = jax.random.normal(ks[6], (B2, N2, D), dtype=jnp.float32)
    x2r = jax.random.normal(ks[7], (B2, N2, D), dtype=jnp.float32)
    out2 = prenorm2in_forward(x1r, x2r, params, fn_add)  # two-output kernel + fn outside
    out2 = jax.block_until_ready(out2)
    ref2 = (_layernorm_ref(x1r, params["g1"], params["b1"])
            + _layernorm_ref(x2r, params["g2"], params["b2"]))
    assert jnp.allclose(out2, ref2, atol=1e-4, rtol=1e-4), "ragged path mismatch"

    print("KERNEL_OK")
</pallas_src>

<mosaic_0001>
module attributes {stable_mosaic.version = 11 : i64} {
  func.func @kernel(%arg0: i32, %arg1: memref<8x128xf32, #tpu.memory_space<vmem>>, %arg2: memref<8x128xf32, #tpu.memory_space<vmem>>, %arg3: memref<4x128xf32, #tpu.memory_space<vmem>>, %arg4: memref<8x128xf32, #tpu.memory_space<vmem>>) attributes {dimension_semantics = [#tpu.dimension_semantics<parallel>], iteration_bounds = array<i64: 2>, scalar_prefetch = 0 : i64, scratch_operands = 0 : i64, tpu.core_type = #tpu.core_type<tc>, window_params = [{transform_indices = @transform_0, window_bounds = array<i64: 8, 128>}, {transform_indices = @transform_1, window_bounds = array<i64: 8, 128>}, {pipeline_mode = #tpu.pipeline_mode<synchronous>, transform_indices = @transform_2, window_bounds = array<i64: 4, 128>}, {transform_indices = @transform_3, window_bounds = array<i64: 8, 128>}]} {
    %c0 = arith.constant 0 : index
    %c0_0 = arith.constant 0 : index
    %0 = vector.load %arg1[%c0, %c0_0] : memref<8x128xf32, #tpu.memory_space<vmem>>, vector<8x128xf32>
    %c0_1 = arith.constant 0 : index
    %c0_2 = arith.constant 0 : index
    %1 = vector.load %arg2[%c0_1, %c0_2] : memref<8x128xf32, #tpu.memory_space<vmem>>, vector<8x128xf32>
    %c0_3 = arith.constant 0 : index
    %c0_4 = arith.constant 0 : index
    %2 = vector.load %arg3[%c0_3, %c0_4] : memref<4x128xf32, #tpu.memory_space<vmem>>, vector<4x128xf32>
    %3 = vector.extract_strided_slice %2 {offsets = [0, 0], sizes = [1, 128], strides = [1, 1]} : vector<4x128xf32> to vector<1x128xf32>
    %4 = vector.extract_strided_slice %2 {offsets = [1, 0], sizes = [1, 128], strides = [1, 1]} : vector<4x128xf32> to vector<1x128xf32>
    %cst = arith.constant dense<0.000000e+00> : vector<8xf32>
    %5 = vector.multi_reduction <add>, %0, %cst [1] : vector<8x128xf32> to vector<8xf32>
    %6 = vector.shape_cast %5 : vector<8xf32> to vector<8x1xf32>
    %cst_5 = arith.constant 1.280000e+02 : f32
    %7 = vector.broadcast %cst_5 : f32 to vector<8x1xf32>
    %8 = arith.divf %6, %7 : vector<8x1xf32>
    %9 = arith.mulf %0, %0 : vector<8x128xf32>
    %cst_6 = arith.constant dense<0.000000e+00> : vector<8xf32>
    %10 = vector.multi_reduction <add>, %9, %cst_6 [1] : vector<8x128xf32> to vector<8xf32>
    %11 = vector.shape_cast %10 : vector<8xf32> to vector<8x1xf32>
    %cst_7 = arith.constant 1.280000e+02 : f32
    %12 = vector.broadcast %cst_7 : f32 to vector<8x1xf32>
    %13 = arith.divf %11, %12 : vector<8x1xf32>
    %14 = arith.mulf %8, %8 : vector<8x1xf32>
    %15 = arith.subf %13, %14 : vector<8x1xf32>
    %cst_8 = arith.constant 0.000000e+00 : f32
    %16 = vector.broadcast %cst_8 : f32 to vector<8x1xf32>
    %17 = arith.maximumf %15, %16 : vector<8x1xf32>
    %cst_9 = arith.constant 9.99999974E-6 : f32
    %18 = vector.broadcast %cst_9 : f32 to vector<8x1xf32>
    %19 = arith.addf %17, %18 : vector<8x1xf32>
    %20 = math.rsqrt %19 : vector<8x1xf32>
    %21 = vector.broadcast %8 : vector<8x1xf32> to vector<8x128xf32>
    %22 = arith.subf %0, %21 : vector<8x128xf32>
    %23 = vector.broadcast %20 : vector<8x1xf32> to vector<8x128xf32>
    %24 = arith.mulf %22, %23 : vector<8x128xf32>
    %25 = vector.broadcast %3 : vector<1x128xf32> to vector<8x128xf32>
    %26 = arith.mulf %24, %25 : vector<8x128xf32>
    %27 = vector.broadcast %4 : vector<1x128xf32> to vector<8x128xf32>
    %28 = arith.addf %26, %27 : vector<8x128xf32>
    %29 = vector.extract_strided_slice %2 {offsets = [2, 0], sizes = [1, 128], strides = [1, 1]} : vector<4x128xf32> to vector<1x128xf32>
    %30 = vector.extract_strided_slice %2 {offsets = [3, 0], sizes = [1, 128], strides = [1, 1]} : vector<4x128xf32> to vector<1x128xf32>
    %cst_10 = arith.constant dense<0.000000e+00> : vector<8xf32>
    %31 = vector.multi_reduction <add>, %1, %cst_10 [1] : vector<8x128xf32> to vector<8xf32>
    %32 = vector.shape_cast %31 : vector<8xf32> to vector<8x1xf32>
    %cst_11 = arith.constant 1.280000e+02 : f32
    %33 = vector.broadcast %cst_11 : f32 to vector<8x1xf32>
    %34 = arith.divf %32, %33 : vector<8x1xf32>
    %35 = arith.mulf %1, %1 : vector<8x128xf32>
    %cst_12 = arith.constant dense<0.000000e+00> : vector<8xf32>
    %36 = vector.multi_reduction <add>, %35, %cst_12 [1] : vector<8x128xf32> to vector<8xf32>
    %37 = vector.shape_cast %36 : vector<8xf32> to vector<8x1xf32>
    %cst_13 = arith.constant 1.280000e+02 : f32
    %38 = vector.broadcast %cst_13 : f32 to vector<8x1xf32>
    %39 = arith.divf %37, %38 : vector<8x1xf32>
    %40 = arith.mulf %34, %34 : vector<8x1xf32>
    %41 = arith.subf %39, %40 : vector<8x1xf32>
    %cst_14 = arith.constant 0.000000e+00 : f32
    %42 = vector.broadcast %cst_14 : f32 to vector<8x1xf32>
    %43 = arith.maximumf %41, %42 : vector<8x1xf32>
    %cst_15 = arith.constant 9.99999974E-6 : f32
    %44 = vector.broadcast %cst_15 : f32 to vector<8x1xf32>
    %45 = arith.addf %43, %44 : vector<8x1xf32>
    %46 = math.rsqrt %45 : vector<8x1xf32>
    %47 = vector.broadcast %34 : vector<8x1xf32> to vector<8x128xf32>
    %48 = arith.subf %1, %47 : vector<8x128xf32>
    %49 = vector.broadcast %46 : vector<8x1xf32> to vector<8x128xf32>
    %50 = arith.mulf %48, %49 : vector<8x128xf32>
    %51 = vector.broadcast %29 : vector<1x128xf32> to vector<8x128xf32>
    %52 = arith.mulf %50, %51 : vector<8x128xf32>
    %53 = vector.broadcast %30 : vector<1x128xf32> to vector<8x128xf32>
    %54 = arith.addf %52, %53 : vector<8x128xf32>
    %55 = arith.addf %28, %54 : vector<8x128xf32>
    %c0_16 = arith.constant 0 : index
    %c0_17 = arith.constant 0 : index
    %56 = vector.load %arg4[%c0_16, %c0_17] : memref<8x128xf32, #tpu.memory_space<vmem>>, vector<8x128xf32>
    tpu.vector_store %arg4[%c0_16, %c0_17], %55 {strides = array<i32>} : memref<8x128xf32, #tpu.memory_space<vmem>>, vector<8x128xf32>,
    return
  }
  func.func @transform_0(%arg0: i32) -> (i32, i32) {
    %c0_i32 = arith.constant 0 : i32
    %c0_i32_0 = arith.constant 0 : i32
    return %arg0, %c0_i32 : i32, i32
  }
  func.func @transform_1(%arg0: i32) -> (i32, i32) {
    %c0_i32 = arith.constant 0 : i32
    %c0_i32_0 = arith.constant 0 : i32
    return %arg0, %c0_i32 : i32, i32
  }
  func.func @transform_2(%arg0: i32) -> (i32, i32) {
    %c0_i32 = arith.constant 0 : i32
    %c0_i32_0 = arith.constant 0 : i32
    %c0_i32_1 = arith.constant 0 : i32
    return %c0_i32, %c0_i32_0 : i32, i32
  }
  func.func @transform_3(%arg0: i32) -> (i32, i32) {
    %c0_i32 = arith.constant 0 : i32
    %c0_i32_0 = arith.constant 0 : i32
    return %arg0, %c0_i32 : i32, i32
  }
}

</mosaic_0001>

<llo_original>
// kernel: tpu_custom_call.1
$region0: #{tpu_custom_call.1}
  #allocation0 [shape = 'u32[]', space=smem, size = 0x4, offset = 0x4, fixed_abs, tag = 'smem constant byte address 0x4 - core index']
  #allocation1 [shape = 'u32[144,128]{1,0:T(1,128)}', space=vmem, size = 0x12000, scoped, tag = 'internal scratch']
  %s0 = inlined_call_operand.hbm [shape: f32[16,128], index: 0, kind: input, shape index: {}]
  %s1 = inlined_call_operand.hbm [shape: f32[16,128], index: 1, kind: input, shape index: {}]
  %s2 = inlined_call_operand.hbm [shape: f32[4,128], index: 2, kind: input, shape index: {}]
  %s3 = inlined_call_operand.hbm [shape: f32[16,128], index: 3, kind: output, shape index: {}]
  %s4 = sld [smem:[#allocation0]]
  $region57: #{tpu_custom_call.1} parent=0
    _
  %s6 = ssub.s32 1, %s4
  %s7 = scalar_select 0, %s6, %s4
  $region1: #{tpu_custom_call.1} parent=0
    #allocation2 [shape = 'u8[8192]{0}', space=vmem, size = 0x2000, scoped, tag = 'input window, operand 0']
    #allocation3 [shape = 's32[2]{0}', space=sflag, size = 0x8, scoped, tag = 'scoped memory for tpu_custom_call.1']
    #allocation4 [shape = 's32[2]{0}', space=sflag, size = 0x8, scoped, tag = 'scoped memory for tpu_custom_call.1']
    #allocation5 [shape = 'u8[8192]{0}', space=vmem, size = 0x2000, scoped, tag = 'input window, operand 1']
    #allocation6 [shape = 's32[2]{0}', space=sflag, size = 0x8, scoped, tag = 'scoped memory for tpu_custom_call.1']
    #allocation7 [shape = 'u8[2048]{0}', space=vmem, size = 0x800, scoped, tag = 'input window, operand 2, single buffered']
    #allocation8 [shape = 'u8[8192]{0}', space=vmem, size = 0x2000, scoped, tag = 'output window, operand 0']
    %8 = vsyncpa [#allocation3], 0
    %s9 = scalar_lea.sflag [#allocation3], 1
    %10 = vsyncpa %s9, 0
    %11 = vsyncpa [#allocation6], 0
    %s12 = scalar_lea.sflag [#allocation6], 1
    %13 = vsyncpa %s12, 0
    %14 = vsyncpa [#allocation4], 0
    %s15 = scalar_lea.sflag [#allocation4], 1
    %16 = vsyncpa %s15, 0
    loop: start=0, step=1, limit=4
    $region2: #{tpu_custom_call.1} parent=1 // loop_pre_header
      _
    $region3: #{tpu_custom_call.1} parent=1 // loop_header
      %s18 = sphi 0, %s22
      %p19 = scmp.ge.s32.totalorder %s18, 4
      %s28 = sphi 0, %s30
      %s31 = sphi 0, %s28
      %s32 = sphi 0, %s31
      %s48 = sphi 0, %s32
      %s54 = sphi 0, %s56
      %s57 = sphi 0, %s54
      %s58 = sphi 0, %s57
      %s74 = sphi 0, %s58
      %s78 = sphi 0, %s78
      %s80 = sphi 0, %s78
      %s81 = sphi 0, %s80
      %s95 = sphi 0, %s81
      %s101 = sphi 0, %s103
      %s104 = sphi 0, %s101
      %s105 = sphi 0, %s104
      %s121 = sphi 0, %s105
    $region4: #{tpu_custom_call.1} parent=1 // loop_header_branch
      %21 = sbr.rel (%p19) target = $region8
    $region5: #{tpu_custom_call.1} parent=1 // loop_body
      %s23 = ssub.s32 %s18, 1
      %s24 = ssub.s32 %s18, 2
      %s25 = sadd.s32 %s18, 1
      %s26 = ssub.s32 %s18, %s25
      %p27 = scmp.eq.s32.totalorder %s26, 0
      %s29 = sadd.s32 %s28, 1
      %s30 = scalar_select %p27, %s28, %s29
      %p33 = pneg %p27
      %p34 = scmp.eq.s32.totalorder %s18, 1
      %p35 = por %p33, %p34
      %p36 = scmp.ne.s32.totalorder %s28, %s31
      %p37 = scmp.eq.s32.totalorder %s18, 0
      %p38 = por %p36, %p37
      %p39 = scmp.ne.s32.totalorder %s28, %s31
      %p40 = scmp.eq.s32.totalorder %s23, 1
      %p41 = por %p39, %p40
      %p42 = scmp.ne.s32.totalorder %s31, %s32
      %p43 = scmp.eq.s32.totalorder %s23, 0
      %p44 = por %p42, %p43
      %p45 = scmp.ne.s32.totalorder %s31, %s32
      %p46 = scmp.eq.s32.totalorder %s24, 1
      %p47 = por %p45, %p46
      %p49 = scmp.ne.s32.totalorder %s32, %s48
      %p50 = scmp.eq.s32.totalorder %s24, 0
      %p51 = por %p49, %p50
      %s52 = ssub.s32 %s18, %s25
      %p53 = scmp.eq.s32.totalorder %s52, 0
      %s55 = sadd.s32 %s54, 1
      %s56 = scalar_select %p53, %s54, %s55
      %p59 = pneg %p53
      %p60 = scmp.eq.s32.totalorder %s18, 1
      %p61 = por %p59, %p60
      %p62 = scmp.ne.s32.totalorder %s54, %s57
      %p63 = scmp.eq.s32.totalorder %s18, 0
      %p64 = por %p62, %p63
      %p65 = scmp.ne.s32.totalorder %s54, %s57
      %p66 = scmp.eq.s32.totalorder %s23, 1
      %p67 = por %p65, %p66
      %p68 = scmp.ne.s32.totalorder %s57, %s58
      %p69 = scmp.eq.s32.totalorder %s23, 0
      %p70 = por %p68, %p69
      %p71 = scmp.ne.s32.totalorder %s57, %s58
      %p72 = scmp.eq.s32.totalorder %s24, 1
      %p73 = por %p71, %p72
      %p75 = scmp.ne.s32.totalorder %s58, %s74
      %p76 = scmp.eq.s32.totalorder %s24, 0
      %p77 = por %p75, %p76
      %s79 = sadd.s32 %s78, 1
      %p82 = scmp.eq.s32.totalorder %s18, 1
      %p83 = scmp.ne.s32.totalorder %s78, %s80
      %p84 = scmp.eq.s32.totalorder %s18, 0
      %p85 = por %p83, %p84
      %p86 = scmp.ne.s32.totalorder %s78, %s80
      %p87 = scmp.eq.s32.totalorder %s23, 1
      %p88 = por %p86, %p87
      %p89 = scmp.ne.s32.totalorder %s80, %s81
      %p90 = scmp.eq.s32.totalorder %s23, 0
      %p91 = por %p89, %p90
      %p92 = scmp.ne.s32.totalorder %s80, %s81
      %p93 = scmp.eq.s32.totalorder %s24, 1
      %p94 = por %p92, %p93
      %p96 = scmp.ne.s32.totalorder %s81, %s95
      %p97 = scmp.eq.s32.totalorder %s24, 0
      %p98 = por %p96, %p97
      %s99 = ssub.s32 %s18, %s25
      %p100 = scmp.eq.s32.totalorder %s99, 0
      %s102 = sadd.s32 %s101, 1
      %s103 = scalar_select %p100, %s101, %s102
      %p106 = pneg %p100
      %p107 = scmp.eq.s32.totalorder %s18, 1
      %p108 = por %p106, %p107
      %p109 = scmp.ne.s32.totalorder %s101, %s104
      %p110 = scmp.eq.s32.totalorder %s18, 0
      %p111 = por %p109, %p110
      %p112 = scmp.ne.s32.totalorder %s101, %s104
      %p113 = scmp.eq.s32.totalorder %s23, 1
      %p114 = por %p112, %p113
      %p115 = scmp.ne.s32.totalorder %s104, %s105
      %p116 = scmp.eq.s32.totalorder %s23, 0
      %p117 = por %p115, %p116
      %p118 = scmp.ne.s32.totalorder %s104, %s105
      %p119 = scmp.eq.s32.totalorder %s24, 1
      %p120 = por %p118, %p119
      %p122 = scmp.ne.s32.totalorder %s105, %s121
      %p123 = scmp.eq.s32.totalorder %s24, 0
      %p124 = por %p122, %p123
      %p125 = scmp.le.s32.totalorder 1, %s18
      %p126 = scmp.lt.s32.totalorder %s18, 3
      %p127 = pnand %p125, %p126
      %p128 = pneg %p127
      // Predicated region
      $region9: #{tpu_custom_call.1} parent=5 // pred_check
        _
      $region10: #{tpu_custom_call.1} parent=5 // pred_check_branch
        %130 = sbr.rel (%p127) target = $region12
      $region11: #{tpu_custom_call.1} parent=5 // pred_region
        %s131 = ssub.s32 %s18, 1
        // Predicated region
        $region13: #{tpu_custom_call.1} parent=11 // pred_check
          %p132 = pneg %p91
        $region14: #{tpu_custom_call.1} parent=11 // pred_check_branch
          %134 = sbr.rel (%p132) target = $region16
        $region15: #{tpu_custom_call.1} parent=11 // pred_region
          %s136 = ssub.s32 64, 64
          %137 = vsyncadd [#allocation6], %s136
          %s139 = sshll.u32 [#allocation7], 4
          %s140 = int_to_ptr.vmem [resolvable:$true] %s139
          %142 = dma.hbm_to_vmem [thread:$0]  %s2, 64, %s140, [#allocation6]
        $region16: #{tpu_custom_call.1} parent=11 // pred_fallthru
          _
      $region12: #{tpu_custom_call.1} parent=5 // pred_fallthru
        _
      %p143 = scmp.lt.s32.totalorder %s18, 2
      // Predicated region
      $region17: #{tpu_custom_call.1} parent=5 // pred_check
        %p144 = pneg %p143
      $region18: #{tpu_custom_call.1} parent=5 // pred_check_branch
        %146 = sbr.rel (%p144) target = $region20
      $region19: #{tpu_custom_call.1} parent=5 // pred_region
        // Predicated region
        $region21: #{tpu_custom_call.1} parent=19 // pred_check
          %p147 = pneg %p38
        $region22: #{tpu_custom_call.1} parent=19 // pred_check_branch
          %149 = sbr.rel (%p147) target = $region24
        $region23: #{tpu_custom_call.1} parent=19 // pred_region
          %s150 = sand.u32 %s28, 1
          %s151 = scalar_lea.sflag [#allocation3], %s150
          %s152 = sand.u32 %s28, 1
          %s153 = smul.addr %s152, 8
          %s154 = scalar_lea.vmem [#allocation2], %s153
          %s156 = ssub.s32 128, 128
          %157 = vsyncadd %s151, %s156
          %s158 = smul.addr %s18, 128
          %s159 = scalar_lea.hbm %s0, %s158
          %s161 = sshll.u32 %s154, 4
          %s162 = int_to_ptr.vmem [resolvable:$true] %s161
          %164 = dma.hbm_to_vmem [thread:$0]  %s159, 128, %s162, %s151
        $region24: #{tpu_custom_call.1} parent=19 // pred_fallthru
          _
        // Predicated region
        $region25: #{tpu_custom_call.1} parent=19 // pred_check
          %p165 = pneg %p64
        $region26: #{tpu_custom_call.1} parent=19 // pred_check_branch
          %167 = sbr.rel (%p165) target = $region28
        $region27: #{tpu_custom_call.1} parent=19 // pred_region
          %s168 = sand.u32 %s18, 1
          %s169 = scalar_lea.sflag [#allocation6], %s168
          %s170 = sand.u32 %s54, 1
          %s171 = smul.addr %s170, 8
          %s172 = scalar_lea.vmem [#allocation5], %s171
          %s174 = ssub.s32 128, 128
          %175 = vsyncadd %s169, %s174
          %s176 = smul.addr %s18, 128
          %s177 = scalar_lea.hbm %s1, %s176
          %s179 = sshll.u32 %s172, 4
          %s180 = int_to_ptr.vmem [resolvable:$true] %s179
          %182 = dma.hbm_to_vmem [thread:$0]  %s177, 128, %s180, %s169
        $region28: #{tpu_custom_call.1} parent=19 // pred_fallthru
          _
      $region20: #{tpu_custom_call.1} parent=5 // pred_fallthru
        _
      %p183 = scmp.le.s32.totalorder 1, %s18
      %p184 = scmp.lt.s32.totalorder %s18, 3
      %p185 = pnand %p183, %p184
      %p186 = pneg %p185
      // Predicated region
      $region29: #{tpu_custom_call.1} parent=5 // pred_check
        _
      $region30: #{tpu_custom_call.1} parent=5 // pred_check_branch
        %188 = sbr.rel (%p185) target = $region32
      $region31: #{tpu_custom_call.1} parent=5 // pred_region
        %s189 = ssub.s32 %s18, 1
        %s190 = sand.u32 %s31, 1
        %s191 = scalar_lea.sflag [#allocation3], %s190
        %s192 = sand.u32 %s31, 1
        %s193 = smul.addr %s192, 8
        %s194 = scalar_lea.vmem [#allocation2], %s193
        // Predicated region
        $region33: #{tpu_custom_call.1} parent=31 // pred_check
          %p195 = pneg %p44
        $region34: #{tpu_custom_call.1} parent=31 // pred_check_branch
          %197 = sbr.rel (%p195) target = $region36
        $region35: #{tpu_custom_call.1} parent=31 // pred_region
          %198 = dma.done %s191, 128
        $region36: #{tpu_custom_call.1} parent=31 // pred_fallthru
          _
        %s199 = sand.u32 %s23, 1
        %s200 = scalar_lea.sflag [#allocation6], %s199
        %s201 = sand.u32 %s57, 1
        %s202 = smul.addr %s201, 8
        %s203 = scalar_lea.vmem [#allocation5], %s202
        // Predicated region
        $region37: #{tpu_custom_call.1} parent=31 // pred_check
          %p204 = pneg %p70
        $region38: #{tpu_custom_call.1} parent=31 // pred_check_branch
          %206 = sbr.rel (%p204) target = $region40
        $region39: #{tpu_custom_call.1} parent=31 // pred_region
          %207 = dma.done %s200, 128
        $region40: #{tpu_custom_call.1} parent=31 // pred_fallthru
          _
        // Predicated region
        $region41: #{tpu_custom_call.1} parent=31 // pred_check
          %p208 = pneg %p91
        $region42: #{tpu_custom_call.1} parent=31 // pred_check_branch
          %210 = sbr.rel (%p208) target = $region44
        $region43: #{tpu_custom_call.1} parent=31 // pred_region
          %211 = dma.done [#allocation6], 64
        $region44: #{tpu_custom_call.1} parent=31 // pred_fallthru
          _
        %s212 = sand.u32 %s31, 1
        %s213 = scalar_lea.sflag [#allocation3], %s212
        %s214 = sand.u32 %s31, 1
        %s215 = smul.addr %s214, 8
        %s216 = scalar_lea.vmem [#allocation2], %s215
        %p217 = pneg %p44
        %p218 = pneg %p41
        %s219 = sand.u32 %s23, 1
        %s220 = scalar_lea.sflag [#allocation6], %s219
        %s221 = sand.u32 %s57, 1
        %s222 = smul.addr %s221, 8
        %s223 = scalar_lea.vmem [#allocation5], %s222
        %p224 = pneg %p70
        %p225 = pneg %p67
        %p226 = pneg %p91
        %p227 = pneg %p88
        %p228 = pneg %p117
        %p229 = pneg %p114
        %s230 = sand.u32 %s104, 1
        %s231 = scalar_lea.sflag [#allocation4], %s230
        %s232 = sand.u32 %s104, 1
        %s233 = smul.addr %s232, 8
        %s234 = scalar_lea.vmem [#allocation8], %s233
        %v235 = vld [vmem:[%s194] sm:$0xff]
        %v236 = vld [vmem:[%s203] sm:$0xff]
        %v237 = vld [vmem:[#allocation7] sm:$0xf]
        %238 = vadd.xlane.f32.xlu0 %v235
        %v239 = vpop.xlane.xlu0 %238
        %v240 = vrcp.pop 128.0
        %v241 = vmul.f32 %v239, %v240
        %v242 = vmul.f32 %v235, %v235
        %243 = vadd.xlane.f32.xlu0 %v242
        %v244 = vpop.xlane.xlu0 %243
        %v245 = vmul.f32 %v244, %v240
        %v246 = vmul.f32 %v241, %v241
        %v247 = vsub.f32 %v245, %v246
        %v248 = vmax.f32 %v247, 0.0
        %v249 = vadd.f32 %v248, 1e-05
        %v250 = vrsqrt.pop %v249
        %v251 = vsub.f32 %v235, %v241
        %v252 = vmul.f32 %v251, %v250
        %v253 = vlaneseq
        %v254 = vshrl.u32 %v253, 7
        %v255 = vsub.s32 0, %v254
        %v256 = vrot.slane %v237, %v255
        %v257 = vmul.f32 %v252, %v256
        %v258 = vlaneseq
        %v259 = vshrl.u32 %v258, 7
        %v260 = vsub.s32 1, %v259
        %v261 = vrot.slane %v237, %v260
        %v262 = vadd.f32 %v257, %v261
        %263 = vadd.xlane.f32.xlu0 %v236
        %v264 = vpop.xlane.xlu0 %263
        %v265 = vmul.f32 %v264, %v240
        %v266 = vmul.f32 %v236, %v236
        %267 = vadd.xlane.f32.xlu0 %v266
        %v268 = vpop.xlane.xlu0 %267
        %v269 = vmul.f32 %v268, %v240
        %v270 = vmul.f32 %v265, %v265
        %v271 = vsub.f32 %v269, %v270
        %v272 = vmax.f32 %v271, 0.0
        %v273 = vadd.f32 %v272, 1e-05
        %v274 = vrsqrt.pop %v273
        %v275 = vsub.f32 %v236, %v265
        %v276 = vmul.f32 %v275, %v274
        %v277 = vlaneseq
        %v278 = vshrl.u32 %v277, 7
        %v279 = vsub.s32 2, %v278
        %v280 = vrot.slane %v237, %v279
        %v281 = vmul.f32 %v276, %v280
        %v282 = vlaneseq
        %v283 = vshrl.u32 %v282, 7
        %v284 = vsub.s32 3, %v283
        %v285 = vrot.slane %v237, %v284
        %v286 = vadd.f32 %v281, %v285
        %v287 = vadd.f32 %v262, %v286
        %288 = vst [vmem:[%s234] sm:$0xff] %v287
        %s289 = sand.u32 %s104, 1
        %s290 = scalar_lea.sflag [#allocation4], %s289
        %s291 = sand.u32 %s104, 1
        %s292 = smul.addr %s291, 8
        %s293 = scalar_lea.vmem [#allocation8], %s292
        // Predicated region
        $region45: #{tpu_custom_call.1} parent=31 // pred_check
          %p294 = pneg %p114
        $region46: #{tpu_custom_call.1} parent=31 // pred_check_branch
          %296 = sbr.rel (%p294) target = $region48
        $region47: #{tpu_custom_call.1} parent=31 // pred_region
          %s298 = ssub.s32 128, 128
          %299 = vsyncadd %s290, %s298
          %s300 = smul.addr %s23, 128
          %s301 = scalar_lea.hbm %s3, %s300
          %s303 = sshll.u32 %s293, 4
          %s304 = int_to_ptr.vmem [resolvable:$true] %s303
          %306 = dma.vmem_to_hbm [thread:$0]  %s304, 128, %s301, %s290
        $region48: #{tpu_custom_call.1} parent=31 // pred_fallthru
          _
      $region32: #{tpu_custom_call.1} parent=5 // pred_fallthru
        _
      %p307 = scmp.le.s32.totalorder 2, %s18
      // Predicated region
      $region49: #{tpu_custom_call.1} parent=5 // pred_check
        %p308 = pneg %p307
      $region50: #{tpu_custom_call.1} parent=5 // pred_check_branch
        %310 = sbr.rel (%p308) target = $region52
      $region51: #{tpu_custom_call.1} parent=5 // pred_region
        %s311 = ssub.s32 %s18, 2
        // Predicated region
        $region53: #{tpu_custom_call.1} parent=51 // pred_check
          %p312 = pneg %p120
        $region54: #{tpu_custom_call.1} parent=51 // pred_check_branch
          %314 = sbr.rel (%p312) target = $region56
        $region55: #{tpu_custom_call.1} parent=51 // pred_region
          %s315 = sand.u32 %s105, 1
          %s316 = scalar_lea.sflag [#allocation4], %s315
          %s317 = sand.u32 %s105, 1
          %s318 = smul.addr %s317, 8
          %s319 = scalar_lea.vmem [#allocation8], %s318
          %320 = dma.done %s316, 128
        $region56: #{tpu_custom_call.1} parent=51 // pred_fallthru
          _
      $region52: #{tpu_custom_call.1} parent=5 // pred_fallthru
        _
    $region6: #{tpu_custom_call.1} parent=1 // loop_footer
      %s22 = sadd.s32 1, %s18
    $region7: #{tpu_custom_call.1} parent=1 // loop_footer_branch
      %17 = sbr.rel target = $region3
    $region8: #{tpu_custom_call.1} parent=1 // loop_exit
      _
    %321 = vsyncpa [#allocation3], 1
    %s322 = scalar_lea.sflag [#allocation3], 1
    %323 = vsyncpa %s322, 1
    %324 = vsyncpa [#allocation6], 1
    %s325 = scalar_lea.sflag [#allocation6], 1
    %326 = vsyncpa %s325, 1
    %327 = vsyncpa [#allocation4], 1
    %s328 = scalar_lea.sflag [#allocation4], 1
    %329 = vsyncpa %s328, 1

</llo_original>
